<compile_context>
chip_gen: v5e
topology: v5e:2x2
jax: 0.10.0
libtpu: 0.0.40
codegen_flags: <defaults>
</compile_context>

<pallas_src>
import math

import jax
import jax.numpy as jnp
from jax.experimental import pallas as pl
from jax.experimental.pallas import tpu as pltpu


def _make_kernel(g: int):
    """Kernel body; g = number of batch rows folded into the lane axis (static)."""

    def kernel(time_ref, w_ref, phase_ref, out_ref):
        if g == 1:
            # (TB, 1) * (1, L) lane broadcast -- cheap, no cross-chunk mapping needed.
            args = time_ref[...] * w_ref[...] + phase_ref[...]
        else:
            # (TB, g) @ (g, L) block-diagonal weight: timestep c of each folded row
            # lands on lanes [c*dim, (c+1)*dim).  Lane replication on the idle MXU.
            args = jnp.dot(time_ref[...], w_ref[...],
                           preferred_element_type=jnp.float32) + phase_ref[...]
        # Single full-lane-width store; cos half comes from the +pi/2 phase.
        out_ref[...] = jnp.sin(args).astype(out_ref.dtype)

    return kernel


def _choose_fold(batch: int, dim: int) -> int:
    """Pick g (power of 2 dividing batch): prefer g*dim % 128 == 0 (fully unmasked
    stores), then g*dim >= 128, then the largest power-of-2 divisor of batch."""
    g = 1
    while g <= batch:
        if batch % g == 0 and (g * dim) % 128 == 0:
            return g
        g *= 2
    g = 1
    while g <= batch:
        if batch % g == 0 and g * dim >= 128:
            return g
        g *= 2
    g = 1
    while g * 2 <= batch and batch % (g * 2) == 0:
        g *= 2
    return g


def _choose_tile_rows(rows: int, lane_width: int, out_itemsize: int) -> int:
    """Rows per grid step.  ~4 MiB output tile (8 MiB double-buffered) keeps us
    inside v5e's 16 MiB scoped-VMEM default.  If everything fits one block and
    rows >= 16, split into >= 2 steps so the "parallel" axis spans both v7x TCs."""
    row_bytes = lane_width * out_itemsize
    budget_rows = max(256, (4 * 1024 * 1024) // row_bytes)
    tb = min(rows, budget_rows)
    if tb == rows:
        if rows >= 16:
            tb = ((pl.cdiv(rows, 2) + 7) // 8) * 8     # two (or so) grid steps
        else:
            return rows                                 # full extent: always legal
        return tb
    return max(8, (tb // 8) * 8)                        # sublane-friendly tile


def sinusoidal_position_embeddings(time: jax.Array, dim: int,
                                   out_dtype=jnp.float32) -> jax.Array:
    """time: (B,) float array -> (B, dim) embeddings laid out as [sin | cos]."""
    assert dim % 2 == 0 and dim >= 4, "dim must be even and >= 4"
    (batch,) = time.shape
    half = dim // 2

    # Hoisted frequency table: exp(-k * log(10000) / (half - 1)), k = 0..half-1.
    scale = -(math.log(10000.0) / (half - 1))
    freqs = jnp.exp(jnp.arange(half, dtype=jnp.float32) * scale)       # (half,)
    freq_row = jnp.concatenate([freqs, freqs])                         # (dim,) [sin|cos]

    g = _choose_fold(batch, dim)
    rows = batch // g
    lane_width = g * dim

    # Block-diagonal weight (g, lane_width): row c carries freq_row in chunk c.
    if g == 1:
        w = freq_row.reshape(1, dim)
    else:
        eye = jnp.eye(g, dtype=jnp.float32)
        w = (eye[:, :, None] * freq_row[None, None, :]).reshape(g, lane_width)

    # Phase table: 0 for the sin half, pi/2 for the cos half of every chunk.
    phase_row = jnp.concatenate(
        [jnp.zeros((half,), jnp.float32),
         jnp.full((half,), jnp.float32(math.pi / 2.0))])               # (dim,)
    phase = jnp.tile(phase_row, (g,)).reshape(1, lane_width)

    time_folded = time.astype(jnp.float32).reshape(rows, g)

    out_itemsize = jnp.dtype(out_dtype).itemsize
    tb = _choose_tile_rows(rows, lane_width, out_itemsize)
    grid = (pl.cdiv(rows, tb),)

    cost = pl.CostEstimate(
        flops=2 * batch * dim + 2 * batch * g * dim,   # mul/add + tiny block-diag dot
        transcendentals=batch * dim,
        bytes_accessed=batch * 4 + (g + 1) * lane_width * 4 + batch * dim * out_itemsize,
    )

    out_folded = pl.pallas_call(
        _make_kernel(g),
        out_shape=jax.ShapeDtypeStruct((rows, lane_width), out_dtype),
        grid=grid,
        in_specs=[
            pl.BlockSpec((tb, g), lambda i: (i, 0)),             # folded timesteps
            pl.BlockSpec((g, lane_width), lambda i: (0, 0)),     # resident weight
            pl.BlockSpec((1, lane_width), lambda i: (0, 0)),     # resident phase
        ],
        out_specs=pl.BlockSpec((tb, lane_width), lambda i: (i, 0)),
        compiler_params=pltpu.CompilerParams(
            dimension_semantics=("parallel",)),
        cost_estimate=cost,
    )(time_folded, w, phase)

    # Undo the lane fold: (rows, g*dim) -> (batch, dim) is a free contiguous reshape.
    return out_folded.reshape(batch, dim)


def _reference(time: jax.Array, dim: int) -> jax.Array:
    half = dim // 2
    emb = math.log(10000.0) / (half - 1)
    emb = jnp.exp(jnp.arange(half, dtype=jnp.float32) * -emb)
    emb = time.astype(jnp.float32)[:, None] * emb[None, :]
    return jnp.concatenate([jnp.sin(emb), jnp.cos(emb)], axis=-1)


if __name__ == "__main__":
    key = jax.random.PRNGKey(0)

    # Case 1: small dim -> lane-dense fold (g=4) + block-diagonal MXU path.
    # Case 2: wide dim, rows>=16 -> g=1 broadcast path, grid split into 2 steps.
    # Case 3: dim=128 -> previously the masked half-slab case; now one dense store.
    cases = [(8, 32), (16, 256), (4, 128)]
    for idx, (B, DIM) in enumerate(cases):
        t = jax.random.uniform(jax.random.fold_in(key, idx), (B,),
                               dtype=jnp.float32, minval=0.0, maxval=1000.0)
        out = jax.block_until_ready(sinusoidal_position_embeddings(t, DIM))
        ref = _reference(t, DIM)
        assert out.shape == (B, DIM)
        # cos-as-sin(x + pi/2) deviates from a direct cos by up to ~3e-5 abs for
        # arguments ~1e3 (f32 rounding of the argument sum) -> 1e-4 atol.
        err = float(jnp.max(jnp.abs(out - ref)))
        assert jnp.allclose(out, ref, atol=1e-4, rtol=1e-5), f"max abs err {err}"

    print("KERNEL_OK")
</pallas_src>

<mosaic_0001>
module attributes {stable_mosaic.version = 11 : i64} {
  func.func @kernel(%arg0: i32, %arg1: memref<2x4xf32, #tpu.memory_space<vmem>>, %arg2: memref<4x128xf32, #tpu.memory_space<vmem>>, %arg3: memref<1x128xf32, #tpu.memory_space<vmem>>, %arg4: memref<2x128xf32, #tpu.memory_space<vmem>>) attributes {dimension_semantics = [#tpu.dimension_semantics<parallel>], iteration_bounds = array<i64: 1>, scalar_prefetch = 0 : i64, scratch_operands = 0 : i64, tpu.core_type = #tpu.core_type<tc>, window_params = [{transform_indices = @transform_0, window_bounds = array<i64: 2, 4>}, {pipeline_mode = #tpu.pipeline_mode<synchronous>, transform_indices = @transform_1, window_bounds = array<i64: 4, 128>}, {pipeline_mode = #tpu.pipeline_mode<synchronous>, transform_indices = @transform_2, window_bounds = array<i64: 1, 128>}, {transform_indices = @transform_3, window_bounds = array<i64: 2, 128>}]} {
    %c0 = arith.constant 0 : index
    %c0_0 = arith.constant 0 : index
    %0 = vector.load %arg1[%c0, %c0_0] : memref<2x4xf32, #tpu.memory_space<vmem>>, vector<2x4xf32>
    %c0_1 = arith.constant 0 : index
    %c0_2 = arith.constant 0 : index
    %1 = vector.load %arg2[%c0_1, %c0_2] : memref<4x128xf32, #tpu.memory_space<vmem>>, vector<4x128xf32>
    %cst = arith.constant dense<0.000000e+00> : vector<2x128xf32>
    %2 = tpu.matmul %0, %1, %cst {dimension_numbers = #tpu.dot_dimension_numbers<[1], [0], [0], [1], [0, 0, 1, 1], [], []>} : vector<2x4xf32>, vector<4x128xf32>, vector<2x128xf32> -> vector<2x128xf32>
    %c0_3 = arith.constant 0 : index
    %c0_4 = arith.constant 0 : index
    %3 = vector.load %arg3[%c0_3, %c0_4] : memref<1x128xf32, #tpu.memory_space<vmem>>, vector<1x128xf32>
    %4 = vector.broadcast %3 : vector<1x128xf32> to vector<2x128xf32>
    %5 = arith.addf %2, %4 : vector<2x128xf32>
    %6 = math.sin %5 : vector<2x128xf32>
    %c0_5 = arith.constant 0 : index
    %c0_6 = arith.constant 0 : index
    %7 = vector.load %arg4[%c0_5, %c0_6] : memref<2x128xf32, #tpu.memory_space<vmem>>, vector<2x128xf32>
    tpu.vector_store %arg4[%c0_5, %c0_6], %6 {strides = array<i32>} : memref<2x128xf32, #tpu.memory_space<vmem>>, vector<2x128xf32>,
    return
  }
  func.func @transform_0(%arg0: i32) -> (i32, i32) {
    %c0_i32 = arith.constant 0 : i32
    %c0_i32_0 = arith.constant 0 : i32
    return %arg0, %c0_i32 : i32, i32
  }
  func.func @transform_1(%arg0: i32) -> (i32, i32) {
    %c0_i32 = arith.constant 0 : i32
    %c0_i32_0 = arith.constant 0 : i32
    %c0_i32_1 = arith.constant 0 : i32
    return %c0_i32, %c0_i32_0 : i32, i32
  }
  func.func @transform_2(%arg0: i32) -> (i32, i32) {
    %c0_i32 = arith.constant 0 : i32
    %c0_i32_0 = arith.constant 0 : i32
    %c0_i32_1 = arith.constant 0 : i32
    return %c0_i32, %c0_i32_0 : i32, i32
  }
  func.func @transform_3(%arg0: i32) -> (i32, i32) {
    %c0_i32 = arith.constant 0 : i32
    %c0_i32_0 = arith.constant 0 : i32
    return %arg0, %c0_i32 : i32, i32
  }
}

</mosaic_0001>

<llo_original>
// kernel: tpu_custom_call.1
$region0: #{tpu_custom_call.1}
  #allocation0 [shape = 'u32[]', space=smem, size = 0x4, offset = 0x4, fixed_abs, tag = 'smem constant byte address 0x4 - core index']
  #allocation1 [shape = 'u32[72,128]{1,0:T(1,128)}', space=vmem, size = 0x9000, scoped, tag = 'internal scratch']
  %s0 = inlined_call_operand.hbm [shape: f32[2,4], index: 0, kind: input, shape index: {}]
  %s1 = inlined_call_operand.hbm [shape: f32[4,128], index: 1, kind: input, shape index: {}]
  %s2 = inlined_call_operand.vmem [shape: f32[1,128], index: 2, kind: input, shape index: {}]
  %s3 = inlined_call_operand.hbm [shape: f32[2,128], index: 3, kind: output, shape index: {}]
  %s4 = sld [smem:[#allocation0]]
  $region30: #{tpu_custom_call.1} parent=0
    _
  %s6 = ssub.s32 1, %s4
  %s7 = scalar_select 0, %s6, %s4
  $region1: #{tpu_custom_call.1} parent=0
    #allocation2 [shape = 'u8[1024]{0}', space=vmem, size = 0x400, scoped, tag = 'input window, operand 0, single buffered']
    #allocation3 [shape = 's32[1]{0}', space=sflag, size = 0x4, scoped, tag = 'scoped memory for tpu_custom_call.1']
    #allocation4 [shape = 's32[1]{0}', space=sflag, size = 0x4, scoped, tag = 'scoped memory for tpu_custom_call.1']
    #allocation5 [shape = 'u8[2048]{0}', space=vmem, size = 0x800, scoped, tag = 'input window, operand 1, single buffered']
    #allocation6 [shape = 's32[1]{0}', space=sflag, size = 0x4, scoped, tag = 'scoped memory for tpu_custom_call.1']
    #allocation7 [shape = 'u8[1024]{0}', space=vmem, size = 0x400, scoped, tag = 'output window, operand 0, single buffered']
    %8 = vsyncpa [#allocation3], 0
    %9 = vsyncpa [#allocation6], 0
    %10 = vsyncpa [#allocation4], 0
    // Predicated region
    $region2: #{tpu_custom_call.1} parent=1 // pred_check
      _
    $region3: #{tpu_custom_call.1} parent=1 // pred_check_branch
      %12 = sbr.rel (0) target = $region5
    $region4: #{tpu_custom_call.1} parent=1 // pred_region
      %14 = vsyncadd [#allocation3], 0
      %s16 = sshll.u32 %s0, 4
      %s17 = int_to_ptr.hbm [resolvable:$true] %s16
      %s18 = sshll.u32 [#allocation2], 4
      %s19 = int_to_ptr.vmem [resolvable:$true] %s18
      %21 = dma.hbm_to_vmem [thread:$0]  %s17, 32, %s19, [#allocation3]
    $region5: #{tpu_custom_call.1} parent=1 // pred_fallthru
      _
    // Predicated region
    $region6: #{tpu_custom_call.1} parent=1 // pred_check
      _
    $region7: #{tpu_custom_call.1} parent=1 // pred_check_branch
      %23 = sbr.rel (0) target = $region9
    $region8: #{tpu_custom_call.1} parent=1 // pred_region
      %25 = vsyncadd [#allocation6], 0
      %s27 = sshll.u32 %s1, 4
      %s28 = int_to_ptr.hbm [resolvable:$true] %s27
      %s29 = sshll.u32 [#allocation5], 4
      %s30 = int_to_ptr.vmem [resolvable:$true] %s29
      %32 = dma.hbm_to_vmem [thread:$0]  %s28, 64, %s30, [#allocation6]
    $region9: #{tpu_custom_call.1} parent=1 // pred_fallthru
      _
    // Predicated region
    $region10: #{tpu_custom_call.1} parent=1 // pred_check
      _
    $region11: #{tpu_custom_call.1} parent=1 // pred_check_branch
      %34 = sbr.rel (0) target = $region13
    $region12: #{tpu_custom_call.1} parent=1 // pred_region
      _
    $region13: #{tpu_custom_call.1} parent=1 // pred_fallthru
      _
    // Predicated region
    $region14: #{tpu_custom_call.1} parent=1 // pred_check
      _
    $region15: #{tpu_custom_call.1} parent=1 // pred_check_branch
      %36 = sbr.rel (0) target = $region17
    $region16: #{tpu_custom_call.1} parent=1 // pred_region
      %38 = dma.done [#allocation3], 32
    $region17: #{tpu_custom_call.1} parent=1 // pred_fallthru
      _
    // Predicated region
    $region18: #{tpu_custom_call.1} parent=1 // pred_check
      _
    $region19: #{tpu_custom_call.1} parent=1 // pred_check_branch
      %40 = sbr.rel (0) target = $region21
    $region20: #{tpu_custom_call.1} parent=1 // pred_region
      %42 = dma.done [#allocation6], 64
    $region21: #{tpu_custom_call.1} parent=1 // pred_fallthru
      _
    %v43 = vld [vmem:[#allocation2] sm:$0x3]
    %v44 = vld [vmem:[#allocation5] sm:$0xf]
    %v45 = vld [vmem:[%s2] sm:$0x1]
    %v47 = vperm.slane %v45, 0
    %vm49 = vcmask 31744
    %v51 = vsel %vm49, %v43, 0
    %vm53 = vcmask 1043456
    %v55 = vsel %vm53, %v44, 0
    %57 = vmatpush.msra.mxu0 0.0
    %58 = vmatpush.msra.mxu0 0.0
    %59 = vmatpush.msra.mxu0 0.0
    %60 = vmatpush.msra.mxu0 0.0
    %61 = vmatpush.msra.mxu0 0.0
    %62 = vmatpush.msra.mxu0 0.0
    %63 = vmatpush.msra.mxu0 0.0
    %64 = vmatpush.msra.mxu0 0.0
    %65 = vmatpush.msra.mxu0 0.0
    %66 = vmatpush.msra.mxu0 0.0
    %67 = vmatpush.msra.mxu0 0.0
    %68 = vmatpush.msra.mxu0 0.0
    %69 = vmatpush.msra.mxu0 0.0
    %70 = vmatpush.msra.mxu0 0.0
    %71 = vmatpush.msra.mxu0 0.0
    %72 = vmatpush.msra.mxu0 %v55
    %73 = vmatmul.f32.gmra.mxu0 %v51
    %v74 = vpop.f32.mrf.mxu0
    %v75 = vadd.f32 %v47, %v74
    %76 = vdwg.mxu0
    %v77 = vand.u32 2147483647, %v75
    %vm78 = vcmp.le.f32.partialorder %v77, 0.7853982
    %vm79 = vcmp.lt.s32.totalorder %v75, 0
    %v80 = vand.u32 %v75, 2139095040
    %v81 = vshrl.u32 %v80, 23
    %v82 = vsub.s32 %v81, 127
    %v83 = vand.u32 2147483647, %v75
    %v84 = vand.u32 %v83, 8388607
    %v85 = vor.u32 %v84, 8388608
    %v86 = vsub.s32 0, %v85
    %v87 = vadd.s32 %v82, 1
    %vm88 = vcmp.gt.s32.totalorder %v87, 0
    %v89 = vsel %vm88, %v87, 0
    %v90 = vshrl.u32 %v89, 5
    %v91 = vand.u32 %v89, 31
    %v92 = vsub.s32 32, %v91
    %v93 = vshrl.u32 683565275, %v92
    %v94 = vshll.u32 683565275, %v91
    %v95 = vshrl.u32 2475754826, %v92
    %v96 = vor.u32 %v94, %v95
    %v97 = vshll.u32 2475754826, %v91
    %v98 = vshrl.u32 2131351028, %v92
    %v99 = vor.u32 %v97, %v98
    %v100 = vshll.u32 2131351028, %v91
    %v101 = vshrl.u32 2102212464, %v92
    %v102 = vor.u32 %v100, %v101
    %v103 = vshll.u32 2102212464, %v91
    %v104 = vshrl.u32 920167782, %v92
    %v105 = vor.u32 %v103, %v104
    %v106 = vshll.u32 920167782, %v91
    %v107 = vshrl.u32 1326507024, %v92
    %v108 = vor.u32 %v106, %v107
    %vm109 = vcmp.lt.s32.totalorder %v90, 1
    %vm110 = vcmp.lt.s32.totalorder %v90, 2
    %vm111 = vcmp.lt.s32.totalorder %v90, 3
    %vm112 = vcmp.lt.s32.totalorder %v90, 4
    %v113 = vsel %vm109, %v93, %v96
    %v114 = vsel %vm112, %v102, 2102212464
    %v115 = vsel %vm111, %v99, %v114
    %v116 = vsel %vm110, %v113, %v115
    %v117 = vsel %vm109, %v96, %v99
    %v118 = vsel %vm112, %v105, 920167782
    %v119 = vsel %vm111, %v102, %v118
    %v120 = vsel %vm110, %v117, %v119
    %v121 = vsel %vm109, %v99, %v102
    %v122 = vsel %vm112, %v108, 1326507024
    %v123 = vsel %vm111, %v105, %v122
    %v124 = vsel %vm110, %v121, %v123
    %v125 = vshll.u32 %v85, 8
    %v126 = vand.u32 %v125, 65535
    %v127 = vshrl.u32 %v125, 16
    %v128 = vand.u32 %v124, 65535
    %v129 = vshrl.u32 %v124, 16
    %v130 = vmul.u32 %v126, %v128
    %v131 = vmul.u32 %v126, %v129
    %v132 = vmul.u32 %v127, %v128
    %v133 = vmul.u32 %v127, %v129
    %v134 = vshll.u32 %v131, 16
    %v135 = vshrl.u32 %v131, 16
    %v136 = vshll.u32 %v132, 16
    %v137 = vshrl.u32 %v132, 16
    %vm138 = vc.u32 %v130, %v134
    %v139 = vsel %vm138, 1, 0
    %v140 = vadd.s32 %v130, %v134
    %v141 = vadd.s32 %v133, %v139
    %vm142 = vc.u32 %v140, %v136
    %v143 = vsel %vm142, 1, 0
    %v144 = vadd.s32 %v140, %v136
    %v145 = vadd.s32 %v141, %v143
    %v146 = vadd.s32 %v145, %v135
    %v147 = vadd.s32 %v146, %v137
    %v148 = vand.u32 %v125, 65535
    %v149 = vshrl.u32 %v125, 16
    %v150 = vand.u32 %v120, 65535
    %v151 = vshrl.u32 %v120, 16
    %v152 = vmul.u32 %v148, %v150
    %v153 = vmul.u32 %v148, %v151
    %v154 = vmul.u32 %v149, %v150
    %v155 = vmul.u32 %v149, %v151
    %v156 = vshll.u32 %v153, 16
    %v157 = vshrl.u32 %v153, 16
    %v158 = vshll.u32 %v154, 16
    %v159 = vshrl.u32 %v154, 16
    %vm160 = vc.u32 %v152, %v156
    %v161 = vsel %vm160, 1, 0
    %v162 = vadd.s32 %v152, %v156
    %v163 = vadd.s32 %v155, %v161
    %vm164 = vc.u32 %v162, %v158
    %v165 = vsel %vm164, 1, 0
    %v166 = vadd.s32 %v162, %v158
    %v167 = vadd.s32 %v163, %v165
    %v168 = vadd.s32 %v167, %v157
    %v169 = vadd.s32 %v168, %v159
    %v170 = vmul.u32 %v125, %v116
    %v171 = vadd.s32 %v147, %v166
    %vm172 = vc.u32 %v147, %v166
    %v173 = vadd.s32 %v169, 1
    %v174 = vsel %vm172, %v173, %v169
    %v175 = vadd.s32 %v170, %v174
    %v176 = vadd.s32 %v175, 536870912
    %v177 = vshrl.u32 %v176, 30
    %v178 = vshll.u32 %v177, 30
    %v179 = vsub.s32 %v175, %v178
    %vm180 = vcmp.lt.s32.totalorder %v179, 0
    %v181 = vsub.s32 0, %v179
    %v182 = vsel %vm180, %v181, %v179
    %v183 = vclz %v182
    %v184 = vsub.s32 %v183, 2
    %vm185 = vcmp.gt.s32.totalorder 0, %v184
    %v186 = vsel %vm185, 0, %v184
    %v187 = vsub.s32 32, %v186
    %v188 = vshll.u32 %v179, %v186
    %v189 = vshrl.u32 %v171, %v187
    %v190 = vor.u32 %v188, %v189
    %v191 = vsub.s32 4294967266, %v186
    %v192 = vadd.s32 %v191, 127
    %v193 = vshll.u32 %v192, 23
    %v194 = vor.u32 4788187, %v193
    %v195 = vand.u32 2147483647, %v194
    %v197 = vcvt.s32.f32 %v190
    %v198 = vmul.f32 %v197, %v195
    %v199 = vxor.u32 %v198, 2147483648
    %v200 = vsel %vm79, %v199, %v198
    %v201 = vsub.s32 4, %v177
    %v202 = vsel %vm79, %v201, %v177
    %v203 = vsel %vm78, %v75, %v200
    %v204 = vsel %vm78, 0, %v202
    %v205 = vmul.f32 %v203, %v203
    %v206 = vmul.f32 %v205, -0.001358992
    %v207 = vadd.f32 %v206, 0.041655596
    %v208 = vmul.f32 %v205, %v207
    %v209 = vadd.f32 %v208, -0.4999988
    %v210 = vmul.f32 %v205, %v209
    %v211 = vadd.f32 1.0, %v210
    %v212 = vmul.f32 %v203, %v203
    %v213 = vmul.f32 %v212, -0.00019511016
    %v214 = vadd.f32 %v213, 0.008332121
    %v215 = vmul.f32 %v212, %v214
    %v216 = vadd.f32 %v215, -0.16666654
    %v217 = vmul.f32 %v212, %v216
    %v218 = vadd.f32 %v217, 1.0
    %v219 = vmul.f32 %v218, %v203
    %vm220 = vweird.f32 %v75
    %v221 = vadd.s32 %v204, 3
    %v222 = vand.u32 %v221, 3
    %vm223 = vcmp.lt.s32.totalorder %v222, 2
    %vm224 = vcmp.eq.s32.totalorder %v222, 0
    %v225 = vxor.u32 %v219, 2147483648
    %v226 = vsel %vm224, %v211, %v225
    %vm227 = vcmp.eq.s32.totalorder %v222, 2
    %v228 = vxor.u32 %v211, 2147483648
    %v229 = vsel %vm227, %v228, %v219
    %v230 = vsel %vm223, %v226, %v229
    %v231 = vsel %vm220, nan, %v230
    %232 = vst [vmem:[#allocation7] sm:$0x3] %v231
    // Predicated region
    $region22: #{tpu_custom_call.1} parent=1 // pred_check
      _
    $region23: #{tpu_custom_call.1} parent=1 // pred_check_branch
      %234 = sbr.rel (0) target = $region25
    $region24: #{tpu_custom_call.1} parent=1 // pred_region
      %236 = vsyncadd [#allocation4], 0
      %s238 = sshll.u32 [#allocation7], 4
      %s239 = int_to_ptr.vmem [resolvable:$true] %s238
      %s240 = sshll.u32 %s3, 4
      %s241 = int_to_ptr.hbm [resolvable:$true] %s240
      %243 = dma.vmem_to_hbm [thread:$0]  %s239, 32, %s241, [#allocation4]
    $region25: #{tpu_custom_call.1} parent=1 // pred_fallthru
      _
    // Predicated region
    $region26: #{tpu_custom_call.1} parent=1 // pred_check
      _
    $region27: #{tpu_custom_call.1} parent=1 // pred_check_branch
      %245 = sbr.rel (0) target = $region29
    $region28: #{tpu_custom_call.1} parent=1 // pred_region
      %247 = dma.done [#allocation4], 32
    $region29: #{tpu_custom_call.1} parent=1 // pred_fallthru
      _
    %248 = vsyncpa [#allocation3], 1
    %249 = vsyncpa [#allocation6], 1
    %250 = vsyncpa [#allocation4], 1

</llo_original>
